<compile_context>
chip_gen: v6e
topology: v6e:2x2x1
jax: 0.10.0
libtpu: 0.0.40
codegen_flags: <defaults>
</compile_context>

<pallas_src>
import jax
import jax.numpy as jnp
from jax import lax
from jax.experimental import pallas as pl
from jax.experimental.pallas import tpu as pltpu


def _linear_kernel(x_ref, w_ref, b_ref, o_ref):
    # x_ref: (B, D)   activations
    # w_ref: (D, O)   K-major weight (pre-transposed once at init)
    # b_ref: (1, O)   bias row
    # o_ref: (B, O)   output
    #
    # Standard (M,K) x (K,N) contraction -> straight MXU push, f32 accumulate.
    acc = lax.dot_general(
        x_ref[...],
        w_ref[...],
        dimension_numbers=(((1,), (0,)), ((), ())),
        preferred_element_type=jnp.float32,
    )
    # f32 bias add on the VPU (broadcast over the batch rows), cast to out dtype.
    o_ref[...] = (acc + b_ref[...]).astype(o_ref.dtype)


def prepare_params(weight, bias):
    """One-time, init-time parameter layout prep (outside the jitted forward).

    weight: (O, D) PyTorch nn.Linear layout  ->  (D, O) K-major rhs
    bias:   (O,)                              ->  (1, O) bias row
    """
    w_t = jnp.asarray(weight).T
    b2d = jnp.asarray(bias).reshape(1, -1)
    return w_t, b2d


@jax.jit
def logistic_regression_forward(x, w_t, b2d):
    """x: (B, D), w_t: (D, O), b2d: (1, O)  ->  (B, O) = x @ W^T + b.

    Single-shot pallas_call (grid=()): whole operands resident in VMEM,
    full-array block shapes, no per-call padding or slicing.
    """
    B, _ = x.shape
    O = w_t.shape[1]
    return pl.pallas_call(
        _linear_kernel,
        out_shape=jax.ShapeDtypeStruct((B, O), x.dtype),
        in_specs=[
            pl.BlockSpec(memory_space=pltpu.MemorySpace.VMEM),
            pl.BlockSpec(memory_space=pltpu.MemorySpace.VMEM),
            pl.BlockSpec(memory_space=pltpu.MemorySpace.VMEM),
        ],
        out_specs=pl.BlockSpec(memory_space=pltpu.MemorySpace.VMEM),
    )(x, w_t, b2d)


if __name__ == "__main__":
    # Small shapes consistent with the module: batch=8, input_dim=32, output_dim=4
    batch, input_dim, output_dim = 8, 32, 4

    key = jax.random.PRNGKey(0)
    kx, kw, kb = jax.random.split(key, 3)

    x = jax.random.normal(kx, (batch, input_dim), dtype=jnp.float32)
    # Deterministic parameter init (mimics nn.Linear uniform(-1/sqrt(D), 1/sqrt(D)))
    bound = 1.0 / (input_dim ** 0.5)
    weight = jax.random.uniform(
        kw, (output_dim, input_dim), dtype=jnp.float32, minval=-bound, maxval=bound
    )
    bias = jax.random.uniform(
        kb, (output_dim,), dtype=jnp.float32, minval=-bound, maxval=bound
    )

    # One-time parameter layout prep (outside the jitted hot path).
    w_t, b2d = prepare_params(weight, bias)

    y = logistic_regression_forward(x, w_t, b2d)
    jax.block_until_ready(y)

    # Correctness check against plain-JAX reference of x @ W^T + b
    y_ref = x @ weight.T + bias
    assert y.shape == (batch, output_dim), f"bad shape {y.shape}"
    assert jnp.allclose(y, y_ref, atol=1e-5, rtol=1e-5), "mismatch vs reference"

    print("KERNEL_OK")
</pallas_src>

<mosaic_0001>
module attributes {stable_mosaic.version = 11 : i64} {
  func.func @_linear_kernel(%arg0: memref<8x32xf32, #tpu.memory_space<vmem>>, %arg1: memref<32x4xf32, #tpu.memory_space<vmem>>, %arg2: memref<1x4xf32, #tpu.memory_space<vmem>>, %arg3: memref<8x4xf32, #tpu.memory_space<vmem>>) attributes {dimension_semantics = [], scalar_prefetch = 0 : i64, scratch_operands = 0 : i64, tpu.core_type = #tpu.core_type<tc>} {
    %c0 = arith.constant 0 : index
    %c0_0 = arith.constant 0 : index
    %0 = vector.load %arg0[%c0, %c0_0] : memref<8x32xf32, #tpu.memory_space<vmem>>, vector<8x32xf32>
    %c0_1 = arith.constant 0 : index
    %c0_2 = arith.constant 0 : index
    %1 = vector.load %arg1[%c0_1, %c0_2] : memref<32x4xf32, #tpu.memory_space<vmem>>, vector<32x4xf32>
    %cst = arith.constant dense<0.000000e+00> : vector<8x4xf32>
    %2 = tpu.matmul %0, %1, %cst {dimension_numbers = #tpu.dot_dimension_numbers<[1], [0], [0], [1], [0, 0, 1, 1], [], []>} : vector<8x32xf32>, vector<32x4xf32>, vector<8x4xf32> -> vector<8x4xf32>
    %c0_3 = arith.constant 0 : index
    %c0_4 = arith.constant 0 : index
    %3 = vector.load %arg2[%c0_3, %c0_4] : memref<1x4xf32, #tpu.memory_space<vmem>>, vector<1x4xf32>
    %4 = vector.broadcast %3 : vector<1x4xf32> to vector<8x4xf32>
    %5 = arith.addf %2, %4 : vector<8x4xf32>
    %c0_5 = arith.constant 0 : index
    %c0_6 = arith.constant 0 : index
    %6 = vector.load %arg3[%c0_5, %c0_6] : memref<8x4xf32, #tpu.memory_space<vmem>>, vector<8x4xf32>
    tpu.vector_store %arg3[%c0_5, %c0_6], %5 {strides = array<i32>} : memref<8x4xf32, #tpu.memory_space<vmem>>, vector<8x4xf32>,
    return
  }
}

</mosaic_0001>

<llo_original>
// kernel: logistic_regression_forward.1
$region0: #{logistic_regression_forward.1}
  #allocation0 [shape = 'u32[]', space=smem, size = 0x4, offset = 0x4, fixed_abs, tag = 'smem constant byte address 0x4 - core index']
  #allocation1 [shape = 'u32[144,128]{1,0:T(1,128)}', space=vmem, size = 0x12000, scoped, tag = 'internal scratch']
  %s0 = inlined_call_operand.vmem [shape: f32[8,32], index: 0, kind: input, shape index: {}]
  %s1 = inlined_call_operand.vmem [shape: f32[32,4], index: 1, kind: input, shape index: {}]
  %s2 = inlined_call_operand.vmem [shape: f32[1,4], index: 2, kind: input, shape index: {}]
  %s3 = inlined_call_operand.vmem [shape: f32[8,4], index: 3, kind: output, shape index: {}]
  %s4 = sld [smem:[#allocation0]]
  $region22: #{logistic_regression_forward.1} parent=0
    _
  %s6 = ssub.s32 1, %s4
  %s7 = scalar_select 0, %s6, %s4
  // Predicated region
  $region2: #{logistic_regression_forward.1} parent=0 // pred_check
    _
  $region3: #{logistic_regression_forward.1} parent=0 // pred_check_branch
    %9 = sbr.rel (0) target = $region5
  $region4: #{logistic_regression_forward.1} parent=0 // pred_region
    _
  $region5: #{logistic_regression_forward.1} parent=0 // pred_fallthru
    _
  // Predicated region
  $region6: #{logistic_regression_forward.1} parent=0 // pred_check
    _
  $region7: #{logistic_regression_forward.1} parent=0 // pred_check_branch
    %11 = sbr.rel (0) target = $region9
  $region8: #{logistic_regression_forward.1} parent=0 // pred_region
    _
  $region9: #{logistic_regression_forward.1} parent=0 // pred_fallthru
    _
  // Predicated region
  $region10: #{logistic_regression_forward.1} parent=0 // pred_check
    _
  $region11: #{logistic_regression_forward.1} parent=0 // pred_check_branch
    %13 = sbr.rel (0) target = $region13
  $region12: #{logistic_regression_forward.1} parent=0 // pred_region
    _
  $region13: #{logistic_regression_forward.1} parent=0 // pred_fallthru
    _
  %v14 = vld [vmem:[%s0] sm:$0xff]
  %v15 = vld [vmem:[%s1] sm:$0xff]
  %v16 = vld [vmem:[%s1 + $0x8] sm:$0xff]
  %v17 = vld [vmem:[%s1 + $0x10] sm:$0xff]
  %v18 = vld [vmem:[%s1 + $0x18] sm:$0xff]
  %v19 = vld [vmem:[%s2] sm:$0x1]
  %v21 = vlaneseq
  %v22 = vshrl.u32 %v21, 7
  %v23 = vsub.s32 0, %v22
  %v24 = vrot.slane %v19, %v23
  %vm26 = vcmask 261120
  %v28 = vsel %vm26, %v14, 0
  %30 = vmatprep.subr.mxu0 0.0
  %31 = vmatpush1.msra.mxu0 0.0
  %32 = vmatprep.subr.mxu0 0.0
  %33 = vmatpush1.msra.mxu0 0.0
  %34 = vmatprep.subr.mxu0 0.0
  %35 = vmatpush1.msra.mxu0 0.0
  %36 = vmatprep.subr.mxu0 0.0
  %37 = vmatpush1.msra.mxu0 0.0
  %38 = vmatprep.subr.mxu0 0.0
  %39 = vmatpush1.msra.mxu0 0.0
  %40 = vmatprep.subr.mxu0 0.0
  %41 = vmatpush1.msra.mxu0 0.0
  %42 = vmatprep.subr.mxu0 0.0
  %43 = vmatpush1.msra.mxu0 0.0
  %44 = vmatprep.subr.mxu0 0.0
  %45 = vmatpush1.msra.mxu0 0.0
  %46 = vmatprep.subr.mxu0 0.0
  %47 = vmatpush1.msra.mxu0 0.0
  %48 = vmatprep.subr.mxu0 0.0
  %49 = vmatpush1.msra.mxu0 0.0
  %50 = vmatprep.subr.mxu0 0.0
  %51 = vmatpush1.msra.mxu0 0.0
  %52 = vmatprep.subr.mxu0 0.0
  %53 = vmatpush1.msra.mxu0 0.0
  %54 = vmatprep.subr.mxu0 0.0
  %55 = vmatpush1.msra.mxu0 %v18
  %56 = vmatprep.subr.mxu0 0.0
  %57 = vmatpush1.msra.mxu0 %v17
  %58 = vmatprep.subr.mxu0 0.0
  %59 = vmatpush1.msra.mxu0 %v16
  %60 = vmatprep.subr.mxu0 0.0
  %61 = vmatpush1.msra.mxu0 %v15
  %62 = vmatprep.subr.mxu0 0.0
  %63 = vmatpush2.msra.mxu0 0.0
  %64 = vmatprep.subr.mxu0 0.0
  %65 = vmatpush2.msra.mxu0 0.0
  %66 = vmatprep.subr.mxu0 0.0
  %67 = vmatpush2.msra.mxu0 0.0
  %68 = vmatprep.subr.mxu0 0.0
  %69 = vmatpush2.msra.mxu0 0.0
  %70 = vmatprep.subr.mxu0 0.0
  %71 = vmatpush2.msra.mxu0 0.0
  %72 = vmatprep.subr.mxu0 0.0
  %73 = vmatpush2.msra.mxu0 0.0
  %74 = vmatprep.subr.mxu0 0.0
  %75 = vmatpush2.msra.mxu0 0.0
  %76 = vmatprep.subr.mxu0 0.0
  %77 = vmatpush2.msra.mxu0 0.0
  %78 = vmatprep.subr.mxu0 0.0
  %79 = vmatpush2.msra.mxu0 0.0
  %80 = vmatprep.subr.mxu0 0.0
  %81 = vmatpush2.msra.mxu0 0.0
  %82 = vmatprep.subr.mxu0 0.0
  %83 = vmatpush2.msra.mxu0 0.0
  %84 = vmatprep.subr.mxu0 0.0
  %85 = vmatpush2.msra.mxu0 0.0
  %86 = vmatprep.subr.mxu0 0.0
  %87 = vmatpush2.msra.mxu0 0.0
  %88 = vmatprep.subr.mxu0 0.0
  %89 = vmatpush2.msra.mxu0 0.0
  %90 = vmatprep.subr.mxu0 0.0
  %91 = vmatpush2.msra.mxu0 0.0
  %92 = vmatprep.subr.mxu0 0.0
  %93 = vmatpush2.msra.mxu0 0.0
  %94 = vmatprep.mubr.f32.mxu0 0.0
  %95 = vmatmul.mubr.f32.gmra.mxu0 %v28
  %v96 = vpop.f32.mrf.mxu0
  %v97 = vadd.f32 %v24, %v96
  %v98 = vpop.f32.mrf.mxu0
  %99 = vdwg.mxu0
  %vm100 = vcmask 31744
  %101 = vst.msk [vmem:[%s3] sm:$0xff] %vm100, %v97
  // Predicated region
  $region14: #{logistic_regression_forward.1} parent=0 // pred_check
    _
  $region15: #{logistic_regression_forward.1} parent=0 // pred_check_branch
    %103 = sbr.rel (0) target = $region17
  $region16: #{logistic_regression_forward.1} parent=0 // pred_region
    _
  $region17: #{logistic_regression_forward.1} parent=0 // pred_fallthru
    _
  // Predicated region
  $region18: #{logistic_regression_forward.1} parent=0 // pred_check
    _
  $region19: #{logistic_regression_forward.1} parent=0 // pred_check_branch
    %105 = sbr.rel (0) target = $region21
  $region20: #{logistic_regression_forward.1} parent=0 // pred_region
    _
  $region21: #{logistic_regression_forward.1} parent=0 // pred_fallthru
    _

</llo_original>
